<compile_context>
chip_gen: v7x
topology: tpu7x:2x2x1
jax: 0.10.0
libtpu: 0.0.40
codegen_flags: <defaults>
</compile_context>

<pallas_src>
import functools

import jax
import jax.numpy as jnp
import numpy as np
from jax.experimental import pallas as pl
from jax.experimental.pallas import tpu as pltpu


def _round_up(x, m):
    return (x + m - 1) // m * m


# ----------------------------- Pallas kernel ------------------------------- #
def _deepffm_kernel(num_hidden, h0p, slab_ref, bias_ref, *refs):
    """Fused DeepFFM forward for one batch tile.

    slab_ref : (tB, D) bf16  -- [flat shared emb | ffm pair products | lin weights | 0-pad]
    bias_ref : (1, 1)  f32   -- SMEM scalar: lin_bias + b_out (kept in f32)
    refs     : W0ext, b0, (W_l, b_l) for l = 1..num_hidden-1, W_out, out_ref
               W0ext is (D, h0p+1): columns [:H0] are the BN-folded first MLP layer
               (zero rows over the side/pad lanes); column h0p is a 0/1 mask over the
               side lanes, so the linear+FFM sum comes out of the same MXU dot.
    """
    n_params = 2 * num_hidden + 1
    params = refs[:n_params]
    out_ref = refs[n_params]

    slab = slab_ref[...]                                   # (tB, D)     bf16
    w0 = params[0][...]                                    # (D, h0p+1)  bf16
    b0 = params[1][...]                                    # (1, h0p)    f32

    # First MLP layer and the linear+FFM side reduction in ONE MXU dot.
    h_full = jnp.dot(slab, w0, preferred_element_type=jnp.float32)     # (tB, h0p+1)
    acc = h_full[:, h0p:h0p + 1] + bias_ref[0, 0]          # (tB, 1) f32: side sum + bias
    h = jnp.maximum(h_full[:, :h0p] + b0, 0.0)             # bias + ReLU in f32
    h = h.astype(slab.dtype)                               # bf16 for the next MXU dot

    # Remaining hidden layers (BatchNorm already folded into W/b).
    # TODO(synk): Dropout is identity in eval mode; stochastic drop not modeled.
    for l in range(1, num_hidden):
        w = params[2 * l][...]                             # bf16 (K, H)
        b = params[2 * l + 1][...]                         # f32  (1, H)
        h = jnp.maximum(jnp.dot(h, w, preferred_element_type=jnp.float32) + b, 0.0)
        h = h.astype(slab.dtype)

    w_out = params[2 * num_hidden][...]                    # bf16 (H_last, 1)
    acc = acc + jnp.dot(h, w_out, preferred_element_type=jnp.float32)  # (tB, 1) f32

    # Lane-dense store: broadcast the logit column across 128 lanes, do one tile-aligned
    # XLU transpose, keep row 0 -> (1, tB).  Sigmoid + store then touch ~4 vregs instead
    # of 64 single-lane masked stores.  Padded batch rows hold junk; wrapper slices them.
    acc_row = jnp.transpose(jnp.broadcast_to(acc, (acc.shape[0], 128)))[0:1, :]
    out_ref[...] = jax.nn.sigmoid(acc_row)                 # (1, tB) f32


# ------------------------------- Wrapper ------------------------------------ #
def deepffm_forward(x, params, *, batch_tile=1024, mxu_dtype=jnp.bfloat16):
    (embed_table, lin_table, lin_bias, ffm_tables,
     mlp_ws, mlp_bs, bn_scales, bn_shifts, w_out, b_out, offsets) = params

    B, F = x.shape
    E = embed_table.shape[1]
    num_hidden = len(mlp_ws)

    pairs = [(i, j) for i in range(F - 1) for j in range(i + 1, F)]
    P = len(pairs)
    pair_i = jnp.asarray([p[0] for p in pairs], jnp.int32)
    pair_j = jnp.asarray([p[1] for p in pairs], jnp.int32)

    idx = x + offsets[None, :]                                    # (B, F)

    # ---- embedding gathers (XLA glue; data-dependent gathers aren't a BlockSpec). ----
    # Gather from bf16 tables so the gathers + slab pack move half the bytes.
    # (In production, store the tables in bf16 once instead of casting per call.)
    embed_bf = embed_table.astype(mxu_dtype)
    lin_bf = lin_table.astype(mxu_dtype)
    ffm_bf = ffm_tables.astype(mxu_dtype)

    lin_vals = lin_bf[idx, 0]                                     # (B, F)      bf16
    mlp_in = embed_bf[idx].reshape(B, F * E)                      # (B, F*E)    bf16
    ffm_a = ffm_bf[pair_j[None, :], idx[:, pair_i], :]            # (B, P, E)   bf16
    ffm_b = ffm_bf[pair_i[None, :], idx[:, pair_j], :]            # (B, P, E)   bf16
    ffm_prod = (ffm_a.astype(jnp.float32) *                       # product in f32,
                ffm_b.astype(jnp.float32)).reshape(B, P * E).astype(mxu_dtype)

    # ---- one merged lane-dense slab per row: [emb | ffm | lin | 0-pad to D] ----
    emb_w = F * E
    side_w = P * E + F
    D = _round_up(emb_w + side_w, 128)
    pieces = [mlp_in, ffm_prod, lin_vals]
    if D > emb_w + side_w:
        pieces.append(jnp.zeros((B, D - emb_w - side_w), mxu_dtype))
    slab = jnp.concatenate(pieces, axis=1)                        # (B, D) bf16

    # ---- fold eval-mode BatchNorm into the MLP weights / biases ----
    fused_ws, fused_bs = [], []
    for wl, bl, sc, sh in zip(mlp_ws, mlp_bs, bn_scales, bn_shifts):
        fused_ws.append(wl * sc)
        fused_bs.append((bl * sc + sh).astype(jnp.float32))

    H0 = fused_ws[0].shape[1]
    h0p = _round_up(H0, 128)

    # First-layer weight extended with (a) zero rows over the side/pad lanes and
    # (b) an extra 0/1 "mask" column at the 128-aligned offset h0p that sums the
    # linear + FFM lanes -> side reduction folded into the first matmul.
    w0_ext = jnp.zeros((D, h0p + 1), jnp.float32)
    w0_ext = w0_ext.at[:emb_w, :H0].set(fused_ws[0])
    w0_ext = w0_ext.at[emb_w:emb_w + side_w, h0p].set(1.0)
    b0_pad = jnp.zeros((1, h0p), jnp.float32).at[:, :H0].set(fused_bs[0])

    # Later layers consume the h0p-wide (zero-padded) activation from layer 0.
    later_ws = list(fused_ws[1:]) + [w_out]
    if later_ws[0].shape[0] < h0p:
        later_ws[0] = jnp.concatenate(
            [later_ws[0],
             jnp.zeros((h0p - later_ws[0].shape[0], later_ws[0].shape[1]),
                       later_ws[0].dtype)], axis=0)

    fused_bias = (lin_bias + b_out).reshape(1, 1).astype(jnp.float32)  # f32 SMEM scalar

    # ---- batch tiling: big tiles amortize the ~0.35us/step grid overhead ----
    batch_tile = max(128, _round_up(batch_tile, 128))
    b128 = _round_up(B, 128)
    # Cap the tile so double-buffered slab + f32 intermediates stay well inside scoped
    # VMEM (conservative for v7x: 64 MiB physical / 32 MiB default scoped VMEM).
    vmem_budget = 24 * 1024 * 1024
    per_row_bytes = 2 * (2 * D) + 4 * (h0p + 1) + 2 * h0p + 64
    max_tb = max(128, (vmem_budget // per_row_bytes) // 128 * 128)
    tB = max(128, min(batch_tile, b128, max_tb))
    if b128 >= 256 and b128 <= tB:
        # Keep >= 2 grid steps when the batch allows it so both v7x TensorCores
        # get work under dimension_semantics=("parallel",).
        tB = max(128, _round_up((b128 + 1) // 2, 128))
    B_pad = _round_up(B, tB)
    if B_pad > B:
        slab = jnp.pad(slab, ((0, B_pad - B), (0, 0)))            # zero rows -> junk logits,
    grid_n = B_pad // tB                                          # sliced off below.

    # ---- assemble pallas_call inputs ----
    in_arrays = [slab, fused_bias, w0_ext.astype(mxu_dtype), b0_pad]
    in_specs = [pl.BlockSpec((tB, D), lambda i: (i, 0)),
                pl.BlockSpec(memory_space=pltpu.MemorySpace.SMEM),
                pl.BlockSpec(w0_ext.shape, lambda i: (0, 0)),
                pl.BlockSpec(b0_pad.shape, lambda i: (0, 0))]
    for l in range(1, num_hidden):
        wl = later_ws[l - 1].astype(mxu_dtype)
        bl = fused_bs[l]
        in_arrays += [wl, bl]
        in_specs += [pl.BlockSpec(wl.shape, lambda i: (0, 0)),
                     pl.BlockSpec(bl.shape, lambda i: (0, 0))]
    w_last = later_ws[-1].astype(mxu_dtype)
    in_arrays.append(w_last)
    in_specs.append(pl.BlockSpec(w_last.shape, lambda i: (0, 0)))

    # Advisory cost estimate so XLA can overlap the gather/pack fusion with the call.
    flops = 2 * B_pad * D * (h0p + 1)
    for w in later_ws:
        flops += 2 * B_pad * int(w.shape[0]) * int(w.shape[1])
    bytes_accessed = (B_pad * D * 2 + B_pad * 4 + 4
                      + sum(int(np.prod(a.shape)) * 2 for a in in_arrays[2:]))
    cost = pl.CostEstimate(flops=int(flops), transcendentals=int(B_pad),
                           bytes_accessed=int(bytes_accessed))

    out = pl.pallas_call(
        functools.partial(_deepffm_kernel, num_hidden, h0p),
        out_shape=jax.ShapeDtypeStruct((grid_n, 1, tB), jnp.float32),
        grid=(grid_n,),
        in_specs=in_specs,
        out_specs=pl.BlockSpec((None, 1, tB), lambda i: (i, 0, 0)),
        compiler_params=pltpu.CompilerParams(
            dimension_semantics=("parallel",),
            vmem_limit_bytes=32 * 1024 * 1024),
        cost_estimate=cost,
    )(*in_arrays)
    # Padded rows carry junk logits (harmless); slice them off before returning.
    return out.reshape(-1)[:B]                                    # (B,) == squeeze(1)


# ----------------------------- Param init ----------------------------------- #
def _xavier_uniform(key, shape):
    fan_in, fan_out = shape[0], shape[-1]
    limit = float(np.sqrt(6.0 / (fan_in + fan_out)))
    return jax.random.uniform(key, shape, jnp.float32, -limit, limit)


def init_params(key, field_dims, embed_dim, mlp_dims):
    F = len(field_dims)
    V = int(np.sum(field_dims))
    offsets = jnp.asarray(
        np.concatenate([[0], np.cumsum(field_dims)[:-1]]).astype(np.int32))

    keys = iter(jax.random.split(key, 8 + F + 2 * (len(mlp_dims) + 1)))

    embed_table = _xavier_uniform(next(keys), (V, embed_dim))        # shared embedding
    lin_table = 0.01 * jax.random.normal(next(keys), (V, 1), jnp.float32)
    lin_bias = jnp.zeros((1, 1), jnp.float32)
    ffm_tables = jnp.stack(
        [_xavier_uniform(next(keys), (V, embed_dim)) for _ in range(F)], 0)

    mlp_ws, mlp_bs, bn_scales, bn_shifts = [], [], [], []
    in_dim = F * embed_dim
    eps = 1e-5
    for h in mlp_dims:
        mlp_ws.append(_xavier_uniform(next(keys), (in_dim, h)))
        mlp_bs.append(0.01 * jax.random.normal(next(keys), (1, h), jnp.float32))
        # BatchNorm1d eval: gamma=1, beta=0, running_mean=0, running_var=1
        bn_scales.append(jnp.full((1, h), 1.0 / np.sqrt(1.0 + eps), jnp.float32))
        bn_shifts.append(jnp.zeros((1, h), jnp.float32))
        in_dim = h
    w_out = _xavier_uniform(next(keys), (in_dim, 1))
    b_out = jnp.zeros((1, 1), jnp.float32)

    return (embed_table, lin_table, lin_bias, ffm_tables,
            mlp_ws, mlp_bs, bn_scales, bn_shifts, w_out, b_out, offsets)


# --------------------------- Pure-JAX reference ------------------------------ #
def reference_forward(x, params):
    (embed_table, lin_table, lin_bias, ffm_tables,
     mlp_ws, mlp_bs, bn_scales, bn_shifts, w_out, b_out, offsets) = params
    B, F = x.shape
    E = embed_table.shape[1]
    idx = x + offsets[None, :]

    lin = jnp.sum(lin_table[idx, 0], axis=1, keepdims=True) + lin_bias

    xs = [ffm_tables[i][idx] for i in range(F)]
    ffm = jnp.zeros((B, 1), jnp.float32)
    for i in range(F - 1):
        for j in range(i + 1, F):
            ffm += jnp.sum(xs[j][:, i] * xs[i][:, j], axis=1, keepdims=True)

    h = embed_table[idx].reshape(B, F * E)
    for w, b, sc, sh in zip(mlp_ws, mlp_bs, bn_scales, bn_shifts):
        h = jnp.maximum((h @ w + b) * sc + sh, 0.0)
    mlp = h @ w_out + b_out

    return jax.nn.sigmoid(lin + ffm + mlp)[:, 0]


# --------------------------------- Main -------------------------------------- #
if __name__ == "__main__":
    field_dims = [3, 5, 7, 9]      # -> total_field_dims = 24, 4 fields
    embed_dim = 8
    mlp_dims = (32, 16)
    dropout = 0.2                  # eval mode -> no-op
    B = 16

    key = jax.random.PRNGKey(0)
    kp, kx = jax.random.split(key)
    params = init_params(kp, field_dims, embed_dim, mlp_dims)

    xcols = [jax.random.randint(k, (B,), 0, d)
             for k, d in zip(jax.random.split(kx, len(field_dims)), field_dims)]
    x = jnp.stack(xcols, axis=1).astype(jnp.int32)     # (B, num_fields)

    out = deepffm_forward(x, params, batch_tile=1024)
    out = jax.block_until_ready(out)

    ref = jax.block_until_ready(reference_forward(x, params))
    assert out.shape == (B,)
    # bf16 MXU operands / bf16 table gathers -> looser tolerance than the pure-f32 path.
    np.testing.assert_allclose(np.asarray(out), np.asarray(ref),
                               rtol=3e-2, atol=3e-2)
    print("KERNEL_OK")
</pallas_src>

<mosaic_0001>
module attributes {stable_mosaic.version = 11 : i64} {
  func.func @_deepffm_kernel(%arg0: i32, %arg1: memref<128x128xbf16, #tpu.memory_space<vmem>>, %arg2: memref<1x1xf32, #tpu.memory_space<smem>>, %arg3: memref<128x129xbf16, #tpu.memory_space<vmem>>, %arg4: memref<1x128xf32, #tpu.memory_space<vmem>>, %arg5: memref<128x16xbf16, #tpu.memory_space<vmem>>, %arg6: memref<1x16xf32, #tpu.memory_space<vmem>>, %arg7: memref<16x1xbf16, #tpu.memory_space<vmem>>, %arg8: memref<1x1x128xf32, #tpu.memory_space<vmem>>) attributes {dimension_semantics = [#tpu.dimension_semantics<parallel>], iteration_bounds = array<i64: 1>, scalar_prefetch = 0 : i64, scratch_operands = 0 : i64, tpu.core_type = #tpu.core_type<tc>, window_params = [{transform_indices = @transform_0, window_bounds = array<i64: 128, 128>}, {transform_indices = @transform_1, window_bounds = array<i64: 1, 1>}, {pipeline_mode = #tpu.pipeline_mode<synchronous>, transform_indices = @transform_2, window_bounds = array<i64: 128, 129>}, {pipeline_mode = #tpu.pipeline_mode<synchronous>, transform_indices = @transform_3, window_bounds = array<i64: 1, 128>}, {pipeline_mode = #tpu.pipeline_mode<synchronous>, transform_indices = @transform_4, window_bounds = array<i64: 128, 16>}, {pipeline_mode = #tpu.pipeline_mode<synchronous>, transform_indices = @transform_5, window_bounds = array<i64: 1, 16>}, {pipeline_mode = #tpu.pipeline_mode<synchronous>, transform_indices = @transform_6, window_bounds = array<i64: 16, 1>}, {transform_indices = @transform_7, window_bounds = array<i64: 1, 1, 128>}]} {
    %c0 = arith.constant 0 : index
    %c0_0 = arith.constant 0 : index
    %0 = vector.load %arg1[%c0, %c0_0] : memref<128x128xbf16, #tpu.memory_space<vmem>>, vector<128x128xbf16>
    %c0_1 = arith.constant 0 : index
    %c0_2 = arith.constant 0 : index
    %1 = vector.load %arg3[%c0_1, %c0_2] : memref<128x129xbf16, #tpu.memory_space<vmem>>, vector<128x129xbf16>
    %c0_3 = arith.constant 0 : index
    %c0_4 = arith.constant 0 : index
    %2 = vector.load %arg4[%c0_3, %c0_4] : memref<1x128xf32, #tpu.memory_space<vmem>>, vector<1x128xf32>
    %cst = arith.constant dense<0.000000e+00> : vector<128x129xf32>
    %3 = tpu.matmul %0, %1, %cst {dimension_numbers = #tpu.dot_dimension_numbers<[1], [0], [0], [1], [0, 0, 1, 1], [], []>} : vector<128x128xbf16>, vector<128x129xbf16>, vector<128x129xf32> -> vector<128x129xf32>
    %4 = vector.extract_strided_slice %3 {offsets = [0, 128], sizes = [128, 1], strides = [1, 1]} : vector<128x129xf32> to vector<128x1xf32>
    %c0_5 = arith.constant 0 : index
    %c0_6 = arith.constant 0 : index
    %5 = memref.load %arg2[%c0_5, %c0_6] : memref<1x1xf32, #tpu.memory_space<smem>>
    %6 = vector.broadcast %5 : f32 to vector<128x1xf32>
    %7 = arith.addf %4, %6 : vector<128x1xf32>
    %8 = vector.extract_strided_slice %3 {offsets = [0, 0], sizes = [128, 128], strides = [1, 1]} : vector<128x129xf32> to vector<128x128xf32>
    %9 = vector.broadcast %2 : vector<1x128xf32> to vector<128x128xf32>
    %10 = arith.addf %8, %9 : vector<128x128xf32>
    %cst_7 = arith.constant 0.000000e+00 : f32
    %11 = vector.broadcast %cst_7 : f32 to vector<128x128xf32>
    %12 = arith.maximumf %10, %11 : vector<128x128xf32>
    %13 = arith.truncf %12 : vector<128x128xf32> to vector<128x128xbf16>
    %c0_8 = arith.constant 0 : index
    %c0_9 = arith.constant 0 : index
    %14 = vector.load %arg5[%c0_8, %c0_9] : memref<128x16xbf16, #tpu.memory_space<vmem>>, vector<128x16xbf16>
    %c0_10 = arith.constant 0 : index
    %c0_11 = arith.constant 0 : index
    %15 = vector.load %arg6[%c0_10, %c0_11] : memref<1x16xf32, #tpu.memory_space<vmem>>, vector<1x16xf32>
    %cst_12 = arith.constant dense<0.000000e+00> : vector<128x16xf32>
    %16 = tpu.matmul %13, %14, %cst_12 {dimension_numbers = #tpu.dot_dimension_numbers<[1], [0], [0], [1], [0, 0, 1, 1], [], []>} : vector<128x128xbf16>, vector<128x16xbf16>, vector<128x16xf32> -> vector<128x16xf32>
    %17 = vector.broadcast %15 : vector<1x16xf32> to vector<128x16xf32>
    %18 = arith.addf %16, %17 : vector<128x16xf32>
    %cst_13 = arith.constant 0.000000e+00 : f32
    %19 = vector.broadcast %cst_13 : f32 to vector<128x16xf32>
    %20 = arith.maximumf %18, %19 : vector<128x16xf32>
    %21 = arith.truncf %20 : vector<128x16xf32> to vector<128x16xbf16>
    %c0_14 = arith.constant 0 : index
    %c0_15 = arith.constant 0 : index
    %22 = vector.load %arg7[%c0_14, %c0_15] : memref<16x1xbf16, #tpu.memory_space<vmem>>, vector<16x1xbf16>
    %cst_16 = arith.constant dense<0.000000e+00> : vector<128x1xf32>
    %23 = tpu.matmul %21, %22, %cst_16 {dimension_numbers = #tpu.dot_dimension_numbers<[1], [0], [0], [1], [0, 0, 1, 1], [], []>} : vector<128x16xbf16>, vector<16x1xbf16>, vector<128x1xf32> -> vector<128x1xf32>
    %24 = arith.addf %7, %23 : vector<128x1xf32>
    %25 = vector.shape_cast %24 : vector<128x1xf32> to vector<128x1xf32>
    %26 = vector.broadcast %25 : vector<128x1xf32> to vector<128x128xf32>
    %27 = tpu.transpose %26, [1, 0] : vector<128x128xf32> -> vector<128x128xf32>
    %28 = vector.extract_strided_slice %27 {offsets = [0, 0], sizes = [1, 128], strides = [1, 1]} : vector<128x128xf32> to vector<1x128xf32>
    %29 = arith.negf %28 : vector<1x128xf32>
    %30 = math.exp %29 : vector<1x128xf32>
    %cst_17 = arith.constant 1.000000e+00 : f32
    %31 = vector.broadcast %cst_17 : f32 to vector<1x128xf32>
    %32 = arith.addf %31, %30 : vector<1x128xf32>
    %33 = arith.divf %31, %32 : vector<1x128xf32>
    %c0_18 = arith.constant 0 : index
    %c0_19 = arith.constant 0 : index
    %c0_20 = arith.constant 0 : index
    %34 = vector.load %arg8[%c0_18, %c0_19, %c0_20] : memref<1x1x128xf32, #tpu.memory_space<vmem>>, vector<1x1x128xf32>
    %35 = vector.shape_cast %34 : vector<1x1x128xf32> to vector<1x128xf32>
    %36 = vector.shape_cast %33 : vector<1x128xf32> to vector<1x1x128xf32>
    tpu.vector_store %arg8[%c0_18, %c0_19, %c0_20], %36 {strides = array<i32>} : memref<1x1x128xf32, #tpu.memory_space<vmem>>, vector<1x1x128xf32>,
    return
  }
  func.func @transform_0(%arg0: i32) -> (i32, i32) {
    %c0_i32 = arith.constant 0 : i32
    %c0_i32_0 = arith.constant 0 : i32
    return %arg0, %c0_i32 : i32, i32
  }
  func.func @transform_1(%arg0: i32) -> (i32, i32) {
    %c0_i32 = arith.constant 0 : i32
    %c0_i32_0 = arith.constant 0 : i32
    %c0_i32_1 = arith.constant 0 : i32
    return %c0_i32, %c0_i32_0 : i32, i32
  }
  func.func @transform_2(%arg0: i32) -> (i32, i32) {
    %c0_i32 = arith.constant 0 : i32
    %c0_i32_0 = arith.constant 0 : i32
    %c0_i32_1 = arith.constant 0 : i32
    return %c0_i32, %c0_i32_0 : i32, i32
  }
  func.func @transform_3(%arg0: i32) -> (i32, i32) {
    %c0_i32 = arith.constant 0 : i32
    %c0_i32_0 = arith.constant 0 : i32
    %c0_i32_1 = arith.constant 0 : i32
    return %c0_i32, %c0_i32_0 : i32, i32
  }
  func.func @transform_4(%arg0: i32) -> (i32, i32) {
    %c0_i32 = arith.constant 0 : i32
    %c0_i32_0 = arith.constant 0 : i32
    %c0_i32_1 = arith.constant 0 : i32
    return %c0_i32, %c0_i32_0 : i32, i32
  }
  func.func @transform_5(%arg0: i32) -> (i32, i32) {
    %c0_i32 = arith.constant 0 : i32
    %c0_i32_0 = arith.constant 0 : i32
    %c0_i32_1 = arith.constant 0 : i32
    return %c0_i32, %c0_i32_0 : i32, i32
  }
  func.func @transform_6(%arg0: i32) -> (i32, i32) {
    %c0_i32 = arith.constant 0 : i32
    %c0_i32_0 = arith.constant 0 : i32
    %c0_i32_1 = arith.constant 0 : i32
    return %c0_i32, %c0_i32_0 : i32, i32
  }
  func.func @transform_7(%arg0: i32) -> (i32, i32, i32) {
    %c0_i32 = arith.constant 0 : i32
    %c0_i32_0 = arith.constant 0 : i32
    %c0_i32_1 = arith.constant 0 : i32
    return %arg0, %c0_i32, %c0_i32_0 : i32, i32, i32
  }
}

</mosaic_0001>

<llo_original>
// kernel: tpu_custom_call.1
$region0: #{tpu_custom_call.1}
  #allocation0 [shape = 'u32[]', space=smem, size = 0x4, offset = 0x4, fixed_abs, tag = 'smem constant byte address 0x4 - core index']
  #allocation1 [shape = 'u32[144,128]{1,0:T(1,128)}', space=vmem, size = 0x12000, scoped, tag = 'internal scratch']
  #allocation2 [shape = 'f32[1,1]{1,0:T(1,128)S(6)}', space=smem, size = 0x200, scoped, tag = 'scoped memory for tpu_custom_call.1']
  %s0 = inlined_call_operand.vmem [shape: bf16[128,128], index: 0, kind: input, shape index: {}]
  %s1 = inlined_call_operand.<no memory space> [shape: f32[1,1], index: 1, kind: input, shape index: {}]
  %s2 = inlined_call_operand.vmem [shape: bf16[128,129], index: 2, kind: input, shape index: {}]
  %s3 = inlined_call_operand.vmem [shape: f32[1,128], index: 3, kind: input, shape index: {}]
  %s4 = inlined_call_operand.vmem [shape: bf16[128,16], index: 4, kind: input, shape index: {}]
  %s5 = inlined_call_operand.vmem [shape: f32[1,16], index: 5, kind: input, shape index: {}]
  %s6 = inlined_call_operand.vmem [shape: bf16[16,1], index: 6, kind: input, shape index: {}]
  %s7 = inlined_call_operand.hbm [shape: f32[1,1,128], index: 7, kind: output, shape index: {}]
  %s8 = sld [smem:[#allocation0]]
  $region38: #{tpu_custom_call.1} parent=0
    _
  %s10 = ssub.s32 1, %s8
  %s11 = scalar_select 0, %s10, %s8
  %12 = sst [smem:[#allocation2]] %s1
  $region1: #{tpu_custom_call.1} parent=0
    #allocation3 [shape = 'u8[512]{0}', space=vmem, size = 0x400, scoped, tag = 'output window, operand 0, single buffered']
    #allocation4 [shape = 's32[1]{0}', space=sflag, size = 0x4, scoped, tag = 'scoped memory for tpu_custom_call.1']
    %13 = vsyncpa [#allocation4], 0
    // Predicated region
    $region2: #{tpu_custom_call.1} parent=1 // pred_check
      _
    $region3: #{tpu_custom_call.1} parent=1 // pred_check_branch
      %15 = sbr.rel (0) target = $region5
    $region4: #{tpu_custom_call.1} parent=1 // pred_region
      _
    $region5: #{tpu_custom_call.1} parent=1 // pred_fallthru
      _
    // Predicated region
    $region6: #{tpu_custom_call.1} parent=1 // pred_check
      _
    $region7: #{tpu_custom_call.1} parent=1 // pred_check_branch
      %17 = sbr.rel (0) target = $region9
    $region8: #{tpu_custom_call.1} parent=1 // pred_region
      _
    $region9: #{tpu_custom_call.1} parent=1 // pred_fallthru
      _
    // Predicated region
    $region10: #{tpu_custom_call.1} parent=1 // pred_check
      _
    $region11: #{tpu_custom_call.1} parent=1 // pred_check_branch
      %19 = sbr.rel (0) target = $region13
    $region12: #{tpu_custom_call.1} parent=1 // pred_region
      _
    $region13: #{tpu_custom_call.1} parent=1 // pred_fallthru
      _
    // Predicated region
    $region14: #{tpu_custom_call.1} parent=1 // pred_check
      _
    $region15: #{tpu_custom_call.1} parent=1 // pred_check_branch
      %21 = sbr.rel (0) target = $region17
    $region16: #{tpu_custom_call.1} parent=1 // pred_region
      _
    $region17: #{tpu_custom_call.1} parent=1 // pred_fallthru
      _
    // Predicated region
    $region18: #{tpu_custom_call.1} parent=1 // pred_check
      _
    $region19: #{tpu_custom_call.1} parent=1 // pred_check_branch
      %23 = sbr.rel (0) target = $region21
    $region20: #{tpu_custom_call.1} parent=1 // pred_region
      _
    $region21: #{tpu_custom_call.1} parent=1 // pred_fallthru
      _
    // Predicated region
    $region22: #{tpu_custom_call.1} parent=1 // pred_check
      _
    $region23: #{tpu_custom_call.1} parent=1 // pred_check_branch
      %25 = sbr.rel (0) target = $region25
    $region24: #{tpu_custom_call.1} parent=1 // pred_region
      _
    $region25: #{tpu_custom_call.1} parent=1 // pred_fallthru
      _
    // Predicated region
    $region26: #{tpu_custom_call.1} parent=1 // pred_check
      _
    $region27: #{tpu_custom_call.1} parent=1 // pred_check_branch
      %27 = sbr.rel (0) target = $region29
    $region28: #{tpu_custom_call.1} parent=1 // pred_region
      _
    $region29: #{tpu_custom_call.1} parent=1 // pred_fallthru
      _
    %v29 = vld [vmem:[%s0] sm:$0xf]
    %v30 = vld [vmem:[%s0 + $0x4] sm:$0xf]
    %v31 = vld [vmem:[%s0 + $0x8] sm:$0xf]
    %v32 = vld [vmem:[%s0 + $0xc] sm:$0xf]
    %v33 = vld [vmem:[%s0 + $0x10] sm:$0xf]
    %v34 = vld [vmem:[%s0 + $0x14] sm:$0xf]
    %v35 = vld [vmem:[%s0 + $0x18] sm:$0xf]
    %v36 = vld [vmem:[%s0 + $0x1c] sm:$0xf]
    %v37 = vld [vmem:[%s0 + $0x20] sm:$0xf]
    %v38 = vld [vmem:[%s0 + $0x24] sm:$0xf]
    %v39 = vld [vmem:[%s0 + $0x28] sm:$0xf]
    %v40 = vld [vmem:[%s0 + $0x2c] sm:$0xf]
    %v41 = vld [vmem:[%s0 + $0x30] sm:$0xf]
    %v42 = vld [vmem:[%s0 + $0x34] sm:$0xf]
    %v43 = vld [vmem:[%s0 + $0x38] sm:$0xf]
    %v44 = vld [vmem:[%s0 + $0x3c] sm:$0xf]
    %v45 = vld [vmem:[%s2] sm:$0xff]
    %v46 = vld [vmem:[%s2 + $0x8] sm:$0xff]
    %v47 = vld [vmem:[%s2 + $0x10] sm:$0xff]
    %v48 = vld [vmem:[%s2 + $0x18] sm:$0xff]
    %v49 = vld [vmem:[%s2 + $0x20] sm:$0xff]
    %v50 = vld [vmem:[%s2 + $0x28] sm:$0xff]
    %v51 = vld [vmem:[%s2 + $0x30] sm:$0xff]
    %v52 = vld [vmem:[%s2 + $0x38] sm:$0xff]
    %v53 = vld [vmem:[%s2 + $0x40] sm:$0xff]
    %v54 = vld [vmem:[%s2 + $0x48] sm:$0xff]
    %v55 = vld [vmem:[%s2 + $0x50] sm:$0xff]
    %v56 = vld [vmem:[%s2 + $0x58] sm:$0xff]
    %v57 = vld [vmem:[%s2 + $0x60] sm:$0xff]
    %v58 = vld [vmem:[%s2 + $0x68] sm:$0xff]
    %v59 = vld [vmem:[%s2 + $0x70] sm:$0xff]
    %v60 = vld [vmem:[%s2 + $0x78] sm:$0xff]
    %v61 = vld [vmem:[%s3] sm:$0x1]
    %v78 = vunpack.c.l.b16 %v29
    %v79 = vunpack.c.l.b16 %v30
    %v80 = vunpack.c.l.b16 %v31
    %v81 = vunpack.c.l.b16 %v32
    %v82 = vunpack.c.l.b16 %v33
    %v83 = vunpack.c.l.b16 %v34
    %v84 = vunpack.c.l.b16 %v35
    %v85 = vunpack.c.l.b16 %v36
    %v86 = vunpack.c.l.b16 %v37
    %v87 = vunpack.c.l.b16 %v38
    %v88 = vunpack.c.l.b16 %v39
    %v89 = vunpack.c.l.b16 %v40
    %v90 = vunpack.c.l.b16 %v41
    %v91 = vunpack.c.l.b16 %v42
    %v92 = vunpack.c.l.b16 %v43
    %v93 = vunpack.c.l.b16 %v44
    %v94 = vpack.c.b16 %v79, %v78
    %v95 = vpack.c.b16 %v81, %v80
    %v96 = vpack.c.b16 %v83, %v82
    %v97 = vpack.c.b16 %v85, %v84
    %v98 = vpack.c.b16 %v87, %v86
    %v99 = vpack.c.b16 %v89, %v88
    %v100 = vpack.c.b16 %v91, %v90
    %v101 = vpack.c.b16 %v93, %v92
    %v126 = vunpack.c.l.b16 %v45
    %v127 = vunpack.c.h.b16 %v45
    %v128 = vunpack.c.l.b16 %v46
    %v129 = vunpack.c.h.b16 %v46
    %v130 = vunpack.c.l.b16 %v47
    %v131 = vunpack.c.h.b16 %v47
    %v132 = vunpack.c.l.b16 %v48
    %v133 = vunpack.c.h.b16 %v48
    %v134 = vunpack.c.l.b16 %v49
    %v135 = vunpack.c.h.b16 %v49
    %v136 = vunpack.c.l.b16 %v50
    %v137 = vunpack.c.h.b16 %v50
    %v138 = vunpack.c.l.b16 %v51
    %v139 = vunpack.c.h.b16 %v51
    %v140 = vunpack.c.l.b16 %v52
    %v141 = vunpack.c.h.b16 %v52
    %v142 = vunpack.c.l.b16 %v53
    %v143 = vunpack.c.h.b16 %v53
    %v144 = vunpack.c.l.b16 %v54
    %v145 = vunpack.c.h.b16 %v54
    %v146 = vunpack.c.l.b16 %v55
    %v147 = vunpack.c.h.b16 %v55
    %v148 = vunpack.c.l.b16 %v56
    %v149 = vunpack.c.h.b16 %v56
    %v150 = vunpack.c.l.b16 %v57
    %v151 = vunpack.c.h.b16 %v57
    %v152 = vunpack.c.l.b16 %v58
    %v153 = vunpack.c.h.b16 %v58
    %v154 = vunpack.c.l.b16 %v59
    %v155 = vunpack.c.h.b16 %v59
    %v156 = vunpack.c.l.b16 %v60
    %v157 = vunpack.c.h.b16 %v60
    %v158 = vpack.c.b16 %v128, %v126
    %v159 = vpack.c.b16 %v129, %v127
    %v160 = vpack.c.b16 %v132, %v130
    %v161 = vpack.c.b16 %v133, %v131
    %v162 = vpack.c.b16 %v136, %v134
    %v163 = vpack.c.b16 %v137, %v135
    %v164 = vpack.c.b16 %v140, %v138
    %v165 = vpack.c.b16 %v141, %v139
    %v166 = vpack.c.b16 %v144, %v142
    %v167 = vpack.c.b16 %v145, %v143
    %v168 = vpack.c.b16 %v148, %v146
    %v169 = vpack.c.b16 %v149, %v147
    %v170 = vpack.c.b16 %v152, %v150
    %v171 = vpack.c.b16 %v153, %v151
    %v172 = vpack.c.b16 %v156, %v154
    %v173 = vpack.c.b16 %v157, %v155
    %190 = vmatprep.subr.bf16.mxu0 %v159
    %191 = vmatpush1.bf16.msra.mxu0 %v158
    %192 = vmatprep.subr.bf16.mxu0 %v161
    %193 = vmatpush1.bf16.msra.mxu0 %v160
    %194 = vmatprep.subr.bf16.mxu0 %v163
    %195 = vmatpush1.bf16.msra.mxu0 %v162
    %196 = vmatprep.subr.bf16.mxu0 %v165
    %197 = vmatpush1.bf16.msra.mxu0 %v164
    %198 = vmatprep.subr.bf16.mxu0 %v167
    %199 = vmatpush1.bf16.msra.mxu0 %v166
    %200 = vmatprep.subr.bf16.mxu0 %v169
    %201 = vmatpush1.bf16.msra.mxu0 %v168
    %202 = vmatprep.subr.bf16.mxu0 %v171
    %203 = vmatpush1.bf16.msra.mxu0 %v170
    %204 = vmatprep.subr.bf16.mxu0 %v173
    %205 = vmatpush1.bf16.msra.mxu0 %v172
    %206 = vmatprep.subr.bf16.mxu0 0
    %207 = vmatpush1.bf16.msra.mxu0 0
    %208 = vmatprep.subr.bf16.mxu0 0
    %209 = vmatpush1.bf16.msra.mxu0 0
    %210 = vmatprep.subr.bf16.mxu0 0
    %211 = vmatpush1.bf16.msra.mxu0 0
    %212 = vmatprep.subr.bf16.mxu0 0
    %213 = vmatpush1.bf16.msra.mxu0 0
    %214 = vmatprep.subr.bf16.mxu0 0
    %215 = vmatpush1.bf16.msra.mxu0 0
    %216 = vmatprep.subr.bf16.mxu0 0
    %217 = vmatpush1.bf16.msra.mxu0 0
    %218 = vmatprep.subr.bf16.mxu0 0
    %219 = vmatpush1.bf16.msra.mxu0 0
    %220 = vmatprep.subr.bf16.mxu0 0
    %221 = vmatpush1.bf16.msra.mxu0 0
    %222 = vmatprep.mubr.bf16.mxu0 0
    %223 = vmatmul.mubr.bf16.gmra.mrb[0].mxu0 %v94
    %v224 = vpop.f32.mrb[0].mxu0
    %v225 = vadd.f32 0.0, %v224
    %v226 = vpop.f32.mrb[0].mxu0
    %v227 = vadd.f32 0.0, %v226
    %v228 = vpop.f32.mrb[0].mxu0
    %v229 = vadd.f32 0.0, %v228
    %v230 = vpop.f32.mrb[0].mxu0
    %v231 = vadd.f32 0.0, %v230
    %232 = vmatprep.mubr.bf16.mxu0 0
    %233 = vmatmul.mubr.bf16.gmra.mrb[0].mxu0 %v95
    %v234 = vpop.f32.mrb[0].mxu0
    %v235 = vadd.f32 0.0, %v234
    %v236 = vpop.f32.mrb[0].mxu0
    %v237 = vadd.f32 0.0, %v236
    %v238 = vpop.f32.mrb[0].mxu0
    %v239 = vadd.f32 0.0, %v238
    %v240 = vpop.f32.mrb[0].mxu0
    %v241 = vadd.f32 0.0, %v240
    %242 = vmatprep.mubr.bf16.mxu0 0
    %243 = vmatmul.mubr.bf16.gmra.mrb[0].mxu0 %v96
    %v244 = vpop.f32.mrb[0].mxu0
    %v245 = vadd.f32 0.0, %v244
    %v246 = vpop.f32.mrb[0].mxu0
    %v247 = vadd.f32 0.0, %v246
    %v248 = vpop.f32.mrb[0].mxu0
    %v249 = vadd.f32 0.0, %v248
    %v250 = vpop.f32.mrb[0].mxu0
    %v251 = vadd.f32 0.0, %v250
    %252 = vmatprep.mubr.bf16.mxu0 0
    %253 = vmatmul.mubr.bf16.gmra.mrb[0].mxu0 %v97
    %v254 = vpop.f32.mrb[0].mxu0
    %v255 = vadd.f32 0.0, %v254
    %v256 = vpop.f32.mrb[0].mxu0
    %v257 = vadd.f32 0.0, %v256
    %v258 = vpop.f32.mrb[0].mxu0
    %v259 = vadd.f32 0.0, %v258
    %v260 = vpop.f32.mrb[0].mxu0
    %v261 = vadd.f32 0.0, %v260
    %262 = vmatprep.mubr.bf16.mxu0 0
    %263 = vmatmul.mubr.bf16.gmra.mrb[0].mxu0 %v98
    %v264 = vpop.f32.mrb[0].mxu0
    %v265 = vadd.f32 0.0, %v264
    %v266 = vpop.f32.mrb[0].mxu0
    %v267 = vadd.f32 0.0, %v266
    %v268 = vpop.f32.mrb[0].mxu0
    %v269 = vadd.f32 0.0, %v268
    %v270 = vpop.f32.mrb[0].mxu0
    %v271 = vadd.f32 0.0, %v270
    %272 = vmatprep.mubr.bf16.mxu0 0
    %273 = vmatmul.mubr.bf16.gmra.mrb[0].mxu0 %v99
    %v274 = vpop.f32.mrb[0].mxu0
    %v275 = vadd.f32 0.0, %v274
    %v276 = vpop.f32.mrb[0].mxu0
    %v277 = vadd.f32 0.0, %v276
    %v278 = vpop.f32.mrb[0].mxu0
    %v279 = vadd.f32 0.0, %v278
    %v280 = vpop.f32.mrb[0].mxu0
    %v281 = vadd.f32 0.0, %v280
    %282 = vmatprep.mubr.bf16.mxu0 0
    %283 = vmatmul.mubr.bf16.gmra.mrb[0].mxu0 %v100
    %v284 = vpop.f32.mrb[0].mxu0
    %v285 = vadd.f32 0.0, %v284
    %v286 = vpop.f32.mrb[0].mxu0
    %v287 = vadd.f32 0.0, %v286
    %v288 = vpop.f32.mrb[0].mxu0
    %v289 = vadd.f32 0.0, %v288
    %v290 = vpop.f32.mrb[0].mxu0
    %v291 = vadd.f32 0.0, %v290
    %292 = vmatprep.mubr.bf16.mxu0 0
    %293 = vmatmul.mubr.bf16.gmra.mrb[0].mxu0 %v101
    %v294 = vpop.f32.mrb[0].mxu0
    %v295 = vadd.f32 0.0, %v294
    %v296 = vpop.f32.mrb[0].mxu0
    %v297 = vadd.f32 0.0, %v296
    %v298 = vpop.f32.mrb[0].mxu0
    %v299 = vadd.f32 0.0, %v298
    %v300 = vpop.f32.mrb[0].mxu0
    %v301 = vadd.f32 0.0, %v300
    %302 = vdwg.mxu0
    %s303 = sld [smem:[#allocation2]]
    %v304 = vstv %s303
    %v305 = vadd.f32 %v227, %v304
    %v306 = vadd.f32 %v231, %v304
    %v307 = vadd.f32 %v237, %v304
    %v308 = vadd.f32 %v241, %v304
    %v309 = vadd.f32 %v247, %v304
    %v310 = vadd.f32 %v251, %v304
    %v311 = vadd.f32 %v257, %v304
    %v312 = vadd.f32 %v261, %v304
    %v313 = vadd.f32 %v267, %v304
    %v314 = vadd.f32 %v271, %v304
    %v315 = vadd.f32 %v277, %v304
    %v316 = vadd.f32 %v281, %v304
    %v317 = vadd.f32 %v287, %v304
    %v318 = vadd.f32 %v291, %v304
    %v319 = vadd.f32 %v297, %v304
    %v320 = vadd.f32 %v301, %v304
    %v322 = vlaneseq
    %v323 = vshrl.u32 %v322, 7
    %v324 = vsub.s32 0, %v323
    %v325 = vrot.slane %v61, %v324
    %v327 = vadd.f32 %v225, %v325
    %v328 = vadd.f32 %v229, %v325
    %v329 = vadd.f32 %v235, %v325
    %v330 = vadd.f32 %v239, %v325
    %v331 = vadd.f32 %v245, %v325
    %v332 = vadd.f32 %v249, %v325
    %v333 = vadd.f32 %v255, %v325
    %v334 = vadd.f32 %v259, %v325
    %v335 = vadd.f32 %v265, %v325
    %v336 = vadd.f32 %v269, %v325
    %v337 = vadd.f32 %v275, %v325
    %v338 = vadd.f32 %v279, %v325
    %v339 = vadd.f32 %v285, %v325
    %v340 = vadd.f32 %v289, %v325
    %v341 = vadd.f32 %v295, %v325
    %v342 = vadd.f32 %v299, %v325
    %v343 = vmax.f32 %v327, 0.0
    %v344 = vmax.f32 %v328, 0.0
    %v345 = vmax.f32 %v329, 0.0
    %v346 = vmax.f32 %v330, 0.0
    %v347 = vmax.f32 %v331, 0.0
    %v348 = vmax.f32 %v332, 0.0
    %v349 = vmax.f32 %v333, 0.0
    %v350 = vmax.f32 %v334, 0.0
    %v351 = vmax.f32 %v335, 0.0
    %v352 = vmax.f32 %v336, 0.0
    %v353 = vmax.f32 %v337, 0.0
    %v354 = vmax.f32 %v338, 0.0
    %v355 = vmax.f32 %v339, 0.0
    %v356 = vmax.f32 %v340, 0.0
    %v357 = vmax.f32 %v341, 0.0
    %v358 = vmax.f32 %v342, 0.0
    %v359 = vpack.c.bf16 %v344, %v343
    %v360 = vpack.c.bf16 %v346, %v345
    %v361 = vpack.c.bf16 %v348, %v347
    %v362 = vpack.c.bf16 %v350, %v349
    %v363 = vpack.c.bf16 %v352, %v351
    %v364 = vpack.c.bf16 %v354, %v353
    %v365 = vpack.c.bf16 %v356, %v355
    %v366 = vpack.c.bf16 %v358, %v357
    %v367 = vld [vmem:[%s4] sm:$0xf]
    %v368 = vld [vmem:[%s4 + $0x4] sm:$0xf]
    %v369 = vld [vmem:[%s4 + $0x8] sm:$0xf]
    %v370 = vld [vmem:[%s4 + $0xc] sm:$0xf]
    %v371 = vld [vmem:[%s4 + $0x10] sm:$0xf]
    %v372 = vld [vmem:[%s4 + $0x14] sm:$0xf]
    %v373 = vld [vmem:[%s4 + $0x18] sm:$0xf]
    %v374 = vld [vmem:[%s4 + $0x1c] sm:$0xf]
    %v375 = vld [vmem:[%s4 + $0x20] sm:$0xf]
    %v376 = vld [vmem:[%s4 + $0x24] sm:$0xf]
    %v377 = vld [vmem:[%s4 + $0x28] sm:$0xf]
    %v378 = vld [vmem:[%s4 + $0x2c] sm:$0xf]
    %v379 = vld [vmem:[%s4 + $0x30] sm:$0xf]
    %v380 = vld [vmem:[%s4 + $0x34] sm:$0xf]
    %v381 = vld [vmem:[%s4 + $0x38] sm:$0xf]
    %v382 = vld [vmem:[%s4 + $0x3c] sm:$0xf]
    %v383 = vld [vmem:[%s5] sm:$0x1]
    %v385 = vlaneseq
    %v386 = vshrl.u32 %v385, 7
    %v387 = vsub.s32 0, %v386
    %v388 = vrot.slane %v383, %v387
    %v406 = vunpack.c.l.b16 %v367
    %v407 = vunpack.c.l.b16 %v368
    %v408 = vunpack.c.l.b16 %v369
    %v409 = vunpack.c.l.b16 %v370
    %v410 = vunpack.c.l.b16 %v371
    %v411 = vunpack.c.l.b16 %v372
    %v412 = vunpack.c.l.b16 %v373
    %v413 = vunpack.c.l.b16 %v374
    %v414 = vunpack.c.l.b16 %v375
    %v415 = vunpack.c.l.b16 %v376
    %v416 = vunpack.c.l.b16 %v377
    %v417 = vunpack.c.l.b16 %v378
    %v418 = vunpack.c.l.b16 %v379
    %v419 = vunpack.c.l.b16 %v380
    %v420 = vunpack.c.l.b16 %v381
    %v421 = vunpack.c.l.b16 %v382
    %v422 = vpack.c.b16 %v407, %v406
    %v423 = vpack.c.b16 %v409, %v408
    %v424 = vpack.c.b16 %v411, %v410
    %v425 = vpack.c.b16 %v413, %v412
    %v426 = vpack.c.b16 %v415, %v414
    %v427 = vpack.c.b16 %v417, %v416
    %v428 = vpack.c.b16 %v419, %v418
    %v429 = vpack.c.b16 %v421, %v420
    %438 = vmatprep.subr.bf16.mxu0 0
    %439 = vmatpush1.bf16.msra.mxu0 %v422
    %440 = vmatprep.subr.bf16.mxu0 0
    %441 = vmatpush1.bf16.msra.mxu0 %v423
    %442 = vmatprep.subr.bf16.mxu0 0
    %443 = vmatpush1.bf16.msra.mxu0 %v424
    %444 = vmatprep.subr.bf16.mxu0 0
    %445 = vmatpush1.bf16.msra.mxu0 %v425
    %446 = vmatprep.subr.bf16.mxu0 0
    %447 = vmatpush1.bf16.msra.mxu0 %v426
    %448 = vmatprep.subr.bf16.mxu0 0
    %449 = vmatpush1.bf16.msra.mxu0 %v427
    %450 = vmatprep.subr.bf16.mxu0 0
    %451 = vmatpush1.bf16.msra.mxu0 %v428
    %452 = vmatprep.subr.bf16.mxu0 0
    %453 = vmatpush1.bf16.msra.mxu0 %v429
    %454 = vmatprep.subr.bf16.mxu0 0
    %455 = vmatpush1.bf16.msra.mxu0 0
    %456 = vmatprep.subr.bf16.mxu0 0
    %457 = vmatpush1.bf16.msra.mxu0 0
    %458 = vmatprep.subr.bf16.mxu0 0
    %459 = vmatpush1.bf16.msra.mxu0 0
    %460 = vmatprep.subr.bf16.mxu0 0
    %461 = vmatpush1.bf16.msra.mxu0 0
    %462 = vmatprep.subr.bf16.mxu0 0
    %463 = vmatpush1.bf16.msra.mxu0 0
    %464 = vmatprep.subr.bf16.mxu0 0
    %465 = vmatpush1.bf16.msra.mxu0 0
    %466 = vmatprep.subr.bf16.mxu0 0
    %467 = vmatpush1.bf16.msra.mxu0 0
    %468 = vmatprep.subr.bf16.mxu0 0
    %469 = vmatpush1.bf16.msra.mxu0 0
    %470 = vmatprep.mubr.bf16.mxu0 0
    %471 = vmatmul.mubr.bf16.gmra.mrb[0].mxu0 %v359
    %v472 = vpop.f32.mrb[0].mxu0
    %v473 = vadd.f32 %v388, %v472
    %v474 = vpop.f32.mrb[0].mxu0
    %v475 = vpop.f32.mrb[0].mxu0
    %v476 = vadd.f32 %v388, %v475
    %v477 = vpop.f32.mrb[0].mxu0
    %478 = vmatprep.mubr.bf16.mxu0 0
    %479 = vmatmul.mubr.bf16.gmra.mrb[0].mxu0 %v360
    %v480 = vpop.f32.mrb[0].mxu0
    %v481 = vadd.f32 %v388, %v480
    %v482 = vpop.f32.mrb[0].mxu0
    %v483 = vpop.f32.mrb[0].mxu0
    %v484 = vadd.f32 %v388, %v483
    %v485 = vpop.f32.mrb[0].mxu0
    %486 = vmatprep.mubr.bf16.mxu0 0
    %487 = vmatmul.mubr.bf16.gmra.mrb[0].mxu0 %v361
    %v488 = vpop.f32.mrb[0].mxu0
    %v489 = vadd.f32 %v388, %v488
    %v490 = vpop.f32.mrb[0].mxu0
    %v491 = vpop.f32.mrb[0].mxu0
    %v492 = vadd.f32 %v388, %v491
    %v493 = vpop.f32.mrb[0].mxu0
    %494 = vmatprep.mubr.bf16.mxu0 0
    %495 = vmatmul.mubr.bf16.gmra.mrb[0].mxu0 %v362
    %v496 = vpop.f32.mrb[0].mxu0
    %v497 = vadd.f32 %v388, %v496
    %v498 = vpop.f32.mrb[0].mxu0
    %v499 = vpop.f32.mrb[0].mxu0
    %v500 = vadd.f32 %v388, %v499
    %v501 = vpop.f32.mrb[0].mxu0
    %502 = vmatprep.mubr.bf16.mxu0 0
    %503 = vmatmul.mubr.bf16.gmra.mrb[0].mxu0 %v363
    %v504 = vpop.f32.mrb[0].mxu0
    %v505 = vadd.f32 %v388, %v504
    %v506 = vpop.f32.mrb[0].mxu0
    %v507 = vpop.f32.mrb[0].mxu0
    %v508 = vadd.f32 %v388, %v507
    %v509 = vpop.f32.mrb[0].mxu0
    %510 = vmatprep.mubr.bf16.mxu0 0
    %511 = vmatmul.mubr.bf16.gmra.mrb[0].mxu0 %v364
    %v512 = vpop.f32.mrb[0].mxu0
    %v513 = vadd.f32 %v388, %v512
    %v514 = vpop.f32.mrb[0].mxu0
    %v515 = vpop.f32.mrb[0].mxu0
    %v516 = vadd.f32 %v388, %v515
    %v517 = vpop.f32.mrb[0].mxu0
    %518 = vmatprep.mubr.bf16.mxu0 0
    %519 = vmatmul.mubr.bf16.gmra.mrb[0].mxu0 %v365
    %v520 = vpop.f32.mrb[0].mxu0
    %v521 = vadd.f32 %v388, %v520
    %v522 = vpop.f32.mrb[0].mxu0
    %v523 = vpop.f32.mrb[0].mxu0
    %v524 = vadd.f32 %v388, %v523
    %v525 = vpop.f32.mrb[0].mxu0
    %526 = vmatprep.mubr.bf16.mxu0 0
    %527 = vmatmul.mubr.bf16.gmra.mrb[0].mxu0 %v366
    %v528 = vpop.f32.mrb[0].mxu0
    %v529 = vadd.f32 %v388, %v528
    %v530 = vpop.f32.mrb[0].mxu0
    %v531 = vpop.f32.mrb[0].mxu0
    %v532 = vadd.f32 %v388, %v531
    %v533 = vpop.f32.mrb[0].mxu0
    %534 = vdwg.mxu0
    %v535 = vmax.f32 %v473, 0.0
    %v536 = vmax.f32 %v476, 0.0
    %v537 = vmax.f32 %v481, 0.0
    %v538 = vmax.f32 %v484, 0.0
    %v539 = vmax.f32 %v489, 0.0
    %v540 = vmax.f32 %v492, 0.0
    %v541 = vmax.f32 %v497, 0.0
    %v542 = vmax.f32 %v500, 0.0
    %v543 = vmax.f32 %v505, 0.0
    %v544 = vmax.f32 %v508, 0.0
    %v545 = vmax.f32 %v513, 0.0
    %v546 = vmax.f32 %v516, 0.0
    %v547 = vmax.f32 %v521, 0.0
    %v548 = vmax.f32 %v524, 0.0
    %v549 = vmax.f32 %v529, 0.0
    %v550 = vmax.f32 %v532, 0.0
    %v551 = vpack.c.bf16 %v536, %v535
    %v552 = vpack.c.bf16 %v538, %v537
    %v553 = vpack.c.bf16 %v540, %v539
    %v554 = vpack.c.bf16 %v542, %v541
    %v555 = vpack.c.bf16 %v544, %v543
    %v556 = vpack.c.bf16 %v546, %v545
    %v557 = vpack.c.bf16 %v548, %v547
    %v558 = vpack.c.bf16 %v550, %v549
    %v559 = vld [vmem:[%s6] sm:$0xf]
    %v560 = vld [vmem:[%s6 + $0x4] sm:$0xf]
    %v563 = vunpack.c.l.b16 %v559
    %v564 = vunpack.c.l.b16 %v560
    %v565 = vpack.c.b16 %v564, %v563
    %vm567 = vcmask 130048
    %v569 = vsel %vm567, %v551, 0
    %v572 = vsel %vm567, %v552, 0
    %v575 = vsel %vm567, %v553, 0
    %v578 = vsel %vm567, %v554, 0
    %v581 = vsel %vm567, %v555, 0
    %v584 = vsel %vm567, %v556, 0
    %v587 = vsel %vm567, %v557, 0
    %v590 = vsel %vm567, %v558, 0
    %592 = vmatprep.subr.bf16.mxu0 0
    %593 = vmatpush1.bf16.msra.mxu0 %v565
    %594 = vmatprep.subr.bf16.mxu0 0
    %595 = vmatpush1.bf16.msra.mxu0 0
    %596 = vmatprep.subr.bf16.mxu0 0
    %597 = vmatpush1.bf16.msra.mxu0 0
    %598 = vmatprep.subr.bf16.mxu0 0
    %599 = vmatpush1.bf16.msra.mxu0 0
    %600 = vmatprep.subr.bf16.mxu0 0
    %601 = vmatpush1.bf16.msra.mxu0 0
    %602 = vmatprep.subr.bf16.mxu0 0
    %603 = vmatpush1.bf16.msra.mxu0 0
    %604 = vmatprep.subr.bf16.mxu0 0
    %605 = vmatpush1.bf16.msra.mxu0 0
    %606 = vmatprep.subr.bf16.mxu0 0
    %607 = vmatpush1.bf16.msra.mxu0 0
    %608 = vmatprep.subr.bf16.mxu0 0
    %609 = vmatpush1.bf16.msra.mxu0 0
    %610 = vmatprep.subr.bf16.mxu0 0
    %611 = vmatpush1.bf16.msra.mxu0 0
    %612 = vmatprep.subr.bf16.mxu0 0
    %613 = vmatpush1.bf16.msra.mxu0 0
    %614 = vmatprep.subr.bf16.mxu0 0
    %615 = vmatpush1.bf16.msra.mxu0 0
    %616 = vmatprep.subr.bf16.mxu0 0
    %617 = vmatpush1.bf16.msra.mxu0 0
    %618 = vmatprep.subr.bf16.mxu0 0
    %619 = vmatpush1.bf16.msra.mxu0 0
    %620 = vmatprep.subr.bf16.mxu0 0
    %621 = vmatpush1.bf16.msra.mxu0 0
    %622 = vmatprep.subr.bf16.mxu0 0
    %623 = vmatpush1.bf16.msra.mxu0 0
    %624 = vmatprep.mubr.bf16.mxu0 0
    %625 = vmatmul.mubr.bf16.gmra.mrb[0].mxu0 %v569
    %v626 = vpop.f32.mrb[0].mxu0
    %v627 = vadd.f32 0.0, %v626
    %v628 = vpop.f32.mrb[0].mxu0
    %v629 = vpop.f32.mrb[0].mxu0
    %v630 = vadd.f32 0.0, %v629
    %v631 = vpop.f32.mrb[0].mxu0
    %632 = vmatprep.mubr.bf16.mxu0 0
    %633 = vmatmul.mubr.bf16.gmra.mrb[0].mxu0 %v572
    %v634 = vpop.f32.mrb[0].mxu0
    %v635 = vadd.f32 0.0, %v634
    %v636 = vpop.f32.mrb[0].mxu0
    %v637 = vpop.f32.mrb[0].mxu0
    %v638 = vadd.f32 0.0, %v637
    %v639 = vpop.f32.mrb[0].mxu0
    %640 = vmatprep.mubr.bf16.mxu0 0
    %641 = vmatmul.mubr.bf16.gmra.mrb[0].mxu0 %v575
    %v642 = vpop.f32.mrb[0].mxu0
    %v643 = vadd.f32 0.0, %v642
    %v644 = vpop.f32.mrb[0].mxu0
    %v645 = vpop.f32.mrb[0].mxu0
    %v646 = vadd.f32 0.0, %v645
    %v647 = vpop.f32.mrb[0].mxu0
    %648 = vmatprep.mubr.bf16.mxu0 0
    %649 = vmatmul.mubr.bf16.gmra.mrb[0].mxu0 %v578
    %v650 = vpop.f32.mrb[0].mxu0
    %v651 = vadd.f32 0.0, %v650
    %v652 = vpop.f32.mrb[0].mxu0
    %v653 = vpop.f32.mrb[0].mxu0
    %v654 = vadd.f32 0.0, %v653
    %v655 = vpop.f32.mrb[0].mxu0
    %656 = vmatprep.mubr.bf16.mxu0 0
    %657 = vmatmul.mubr.bf16.gmra.mrb[0].mxu0 %v581
    %v658 = vpop.f32.mrb[0].mxu0
    %v659 = vadd.f32 0.0, %v658
    %v660 = vpop.f32.mrb[0].mxu0
    %v661 = vpop.f32.mrb[0].mxu0
    %v662 = vadd.f32 0.0, %v661
    %v663 = vpop.f32.mrb[0].mxu0
    %664 = vmatprep.mubr.bf16.mxu0 0
    %665 = vmatmul.mubr.bf16.gmra.mrb[0].mxu0 %v584
    %v666 = vpop.f32.mrb[0].mxu0
    %v667 = vadd.f32 0.0, %v666
    %v668 = vpop.f32.mrb[0].mxu0
    %v669 = vpop.f32.mrb[0].mxu0
    %v670 = vadd.f32 0.0, %v669
    %v671 = vpop.f32.mrb[0].mxu0
    %672 = vmatprep.mubr.bf16.mxu0 0
    %673 = vmatmul.mubr.bf16.gmra.mrb[0].mxu0 %v587
    %v674 = vpop.f32.mrb[0].mxu0
    %v675 = vadd.f32 0.0, %v674
    %v676 = vpop.f32.mrb[0].mxu0
    %v677 = vpop.f32.mrb[0].mxu0
    %v678 = vadd.f32 0.0, %v677
    %v679 = vpop.f32.mrb[0].mxu0
    %680 = vmatprep.mubr.bf16.mxu0 0
    %681 = vmatmul.mubr.bf16.gmra.mrb[0].mxu0 %v590
    %v682 = vpop.f32.mrb[0].mxu0
    %v683 = vadd.f32 0.0, %v682
    %v684 = vpop.f32.mrb[0].mxu0
    %v685 = vpop.f32.mrb[0].mxu0
    %v686 = vadd.f32 0.0, %v685
    %v687 = vpop.f32.mrb[0].mxu0
    %688 = vdwg.mxu0
    %v689 = vadd.f32 %v305, %v627
    %v690 = vadd.f32 %v306, %v630
    %v691 = vadd.f32 %v307, %v635
    %v692 = vadd.f32 %v308, %v638
    %v693 = vadd.f32 %v309, %v643
    %v694 = vadd.f32 %v310, %v646
    %v695 = vadd.f32 %v311, %v651
    %v696 = vadd.f32 %v312, %v654
    %v697 = vadd.f32 %v313, %v659
    %v698 = vadd.f32 %v314, %v662
    %v699 = vadd.f32 %v315, %v667
    %v700 = vadd.f32 %v316, %v670
    %v701 = vadd.f32 %v317, %v675
    %v702 = vadd.f32 %v318, %v678
    %v703 = vadd.f32 %v319, %v683
    %v704 = vadd.f32 %v320, %v686
    %706 = vset.pattern.permute.xlu0 0
    %707 = vperm.xlu0 %706, %v689
    %v708 = vpop.permute.xlu0 %707
    %711 = vset.pattern.permute.xlu0 0
    %712 = vperm.xlu0 %711, %v690
    %v713 = vpop.permute.xlu0 %712
    %716 = vset.pattern.permute.xlu0 0
    %717 = vperm.xlu0 %716, %v691
    %v718 = vpop.permute.xlu0 %717
    %721 = vset.pattern.permute.xlu0 0
    %722 = vperm.xlu0 %721, %v692
    %v723 = vpop.permute.xlu0 %722
    %726 = vset.pattern.permute.xlu0 0
    %727 = vperm.xlu0 %726, %v693
    %v728 = vpop.permute.xlu0 %727
    %731 = vset.pattern.permute.xlu0 0
    %732 = vperm.xlu0 %731, %v694
    %v733 = vpop.permute.xlu0 %732
    %736 = vset.pattern.permute.xlu0 0
    %737 = vperm.xlu0 %736, %v695
    %v738 = vpop.permute.xlu0 %737
    %741 = vset.pattern.permute.xlu0 0
    %742 = vperm.xlu0 %741, %v696
    %v743 = vpop.permute.xlu0 %742
    %746 = vset.pattern.permute.xlu0 0
    %747 = vperm.xlu0 %746, %v697
    %v748 = vpop.permute.xlu0 %747
    %751 = vset.pattern.permute.xlu0 0
    %752 = vperm.xlu0 %751, %v698
    %v753 = vpop.permute.xlu0 %752
    %756 = vset.pattern.permute.xlu0 0
    %757 = vperm.xlu0 %756, %v699
    %v758 = vpop.permute.xlu0 %757
    %761 = vset.pattern.permute.xlu0 0
    %762 = vperm.xlu0 %761, %v700
    %v763 = vpop.permute.xlu0 %762
    %766 = vset.pattern.permute.xlu0 0
    %767 = vperm.xlu0 %766, %v701
    %v768 = vpop.permute.xlu0 %767
    %771 = vset.pattern.permute.xlu0 0
    %772 = vperm.xlu0 %771, %v702
    %v773 = vpop.permute.xlu0 %772
    %776 = vset.pattern.permute.xlu0 0
    %777 = vperm.xlu0 %776, %v703
    %v778 = vpop.permute.xlu0 %777
    %781 = vset.pattern.permute.xlu0 0
    %782 = vperm.xlu0 %781, %v704
    %v783 = vpop.permute.xlu0 %782
    %785 = vxpose.xlu0.b32.start [1/16] %v708, 128
    %786 = vxpose.xlu0.b32.cont [2/16] %v713, 128
    %787 = vxpose.xlu0.b32.cont [3/16] %v718, 128
    %788 = vxpose.xlu0.b32.cont [4/16] %v723, 128
    %789 = vxpose.xlu0.b32.cont [5/16] %v728, 128
    %790 = vxpose.xlu0.b32.cont [6/16] %v733, 128
    %791 = vxpose.xlu0.b32.cont [7/16] %v738, 128
    %792 = vxpose.xlu0.b32.cont [8/16] %v743, 128
    %793 = vxpose.xlu0.b32.cont [9/16] %v748, 128
    %794 = vxpose.xlu0.b32.cont [10/16] %v753, 128
    %795 = vxpose.xlu0.b32.cont [11/16] %v758, 128
    %796 = vxpose.xlu0.b32.cont [12/16] %v763, 128
    %797 = vxpose.xlu0.b32.cont [13/16] %v768, 128
    %798 = vxpose.xlu0.b32.cont [14/16] %v773, 128
    %799 = vxpose.xlu0.b32.cont [15/16] %v778, 128
    %800 = vxpose.xlu0.b32.end [16/16] %v783, 128
    %v801 = vpop.trf.xlu0
    %v802 = vpop.trf.xlu0
    %v803 = vpop.trf.xlu0
    %v804 = vpop.trf.xlu0
    %v805 = vpop.trf.xlu0
    %v806 = vpop.trf.xlu0
    %v807 = vpop.trf.xlu0
    %v808 = vpop.trf.xlu0
    %v809 = vpop.trf.xlu0
    %v810 = vpop.trf.xlu0
    %v811 = vpop.trf.xlu0
    %v812 = vpop.trf.xlu0
    %v813 = vpop.trf.xlu0
    %v814 = vpop.trf.xlu0
    %v815 = vpop.trf.xlu0
    %v816 = vpop.trf.xlu0
    %v817 = vxor.u32 %v801, 2147483648
    %v818 = vmul.f32 %v817, 1.442695
    %v819 = vpow.pop %v818
    %v820 = vadd.f32 %v819, 1.0
    %v821 = vrcp.pop %v820
    %v822 = vmul.f32 1.0, %v821
    %823 = vst [vmem:[#allocation3] sm:$0x1] %v822
    // Predicated region
    $region30: #{tpu_custom_call.1} parent=1 // pred_check
      _
    $region31: #{tpu_custom_call.1} parent=1 // pred_check_branch
      %825 = sbr.rel (0) target = $region33
    $region32: #{tpu_custom_call.1} parent=1 // pred_region
      %s827 = ssub.s32 16, 16
      %828 = vsyncadd [#allocation4], %s827
      %s830 = sshll.u32 [#allocation3], 4
      %s831 = int_to_ptr.vmem [resolvable:$true] %s830
      %833 = dma.vmem_to_hbm [thread:$0]  %s831, 16, %s7, [#allocation4]
    $region33: #{tpu_custom_call.1} parent=1 // pred_fallthru
      _
    // Predicated region
    $region34: #{tpu_custom_call.1} parent=1 // pred_check
      _
    $region35: #{tpu_custom_call.1} parent=1 // pred_check_branch
      %835 = sbr.rel (0) target = $region37
    $region36: #{tpu_custom_call.1} parent=1 // pred_region
      %836 = dma.done [#allocation4], 16
    $region37: #{tpu_custom_call.1} parent=1 // pred_fallthru
      _
    %837 = vsyncpa [#allocation4], 1

</llo_original>
